<compile_context>
chip_gen: v7x
topology: tpu7x:2x2x1
jax: 0.10.0
libtpu: 0.0.40
codegen_flags: <defaults>
</compile_context>

<pallas_src>
import functools

import jax
import jax.numpy as jnp
from jax.experimental import pallas as pl
from jax.experimental.pallas import tpu as pltpu


def _self_attention_kernel(x_ref, wq_ref, wk_ref, wv_ref, bq_ref, bk_ref,
                           bv_ref, o_ref, *, batch_tile, seq_len, input_dim,
                           matmul_dtype, approx_reciprocal):
    """One grid step == `batch_tile` batch elements, flattened to rows.

      x_ref        : (batch_tile*S, D) float32 input rows
      w{q,k,v}_ref : (D, D)  pre-transposed projection weights (matmul dtype);
                     the 1/sqrt(D) scale is already folded into wq / bq.
      b{q,k,v}_ref : (1, D)  float32 biases
      o_ref        : (batch_tile*S, D) float32 output rows
    """
    Bt, S, D = batch_tile, seq_len, input_dim

    # Cast on-chip (free VPU work next to the MXU) instead of paying a separate
    # HBM cast pass in the wrapper.
    x = x_ref[...].astype(matmul_dtype)                        # (Bt*S, D)

    # Projection matmuls: f32 accumulation, f32 bias add.
    q = jnp.dot(x, wq_ref[...], preferred_element_type=jnp.float32) + bq_ref[...]
    k = jnp.dot(x, wk_ref[...], preferred_element_type=jnp.float32) + bk_ref[...]
    v = jnp.dot(x, wv_ref[...], preferred_element_type=jnp.float32) + bv_ref[...]

    q = q.astype(matmul_dtype)
    k = k.astype(matmul_dtype)
    v = v.astype(matmul_dtype)

    # Per-batch-element attention on 2-D row slabs.  All slices are static and
    # sublane-aligned (S % 8 == 0), so no relayout copies are emitted.
    for b in range(Bt):
        r0, r1 = b * S, (b + 1) * S
        qb, kb, vb = q[r0:r1, :], k[r0:r1, :], v[r0:r1, :]

        # scores = (Q / sqrt(D)) . K^T -- contract the feature dim directly so
        # no explicit transpose of K is emitted.
        scores = jax.lax.dot_general(
            qb, kb, dimension_numbers=(((1,), (1,)), ((), ())),
            preferred_element_type=jnp.float32)                # (S, S) f32

        # softmax over the key axis (torch.nn.Softmax(dim=2)); f32 math.
        m = jnp.max(scores, axis=-1, keepdims=True)
        e = jnp.exp(scores - m)
        denom = jnp.sum(e, axis=-1, keepdims=True)
        if approx_reciprocal:
            attn = e * pl.reciprocal(denom, approx=True)       # EUP slot, ~free
        else:
            attn = e / denom                                   # exact softmax

        weighted = jnp.dot(attn.astype(matmul_dtype), vb,
                           preferred_element_type=jnp.float32)  # (S, D) f32
        o_ref[r0:r1, :] = weighted.astype(o_ref.dtype)


def self_attention(x, wq, bq, wk, bk, wv, bv, *, batch_tile=None,
                   matmul_dtype=jnp.bfloat16, approx_reciprocal=True):
    """x: (B, S, D) float32.  Weights in PyTorch layout (out, in); biases (D,)."""
    B, S, D = x.shape
    mm_itemsize = jnp.dtype(matmul_dtype).itemsize

    # PyTorch Linear computes x @ W.T + b, so ship W.T; fold 1/sqrt(D) into Q.
    scale = 1.0 / (float(D) ** 0.5)
    wq_t = (wq.T * scale).astype(matmul_dtype)
    wk_t = wk.T.astype(matmul_dtype)
    wv_t = wv.T.astype(matmul_dtype)
    bq_r = (bq * scale).reshape(1, D).astype(jnp.float32)
    bk_r = bk.reshape(1, D).astype(jnp.float32)
    bv_r = bv.reshape(1, D).astype(jnp.float32)

    # Input stays f32 (the kernel casts on-chip); the flatten is layout-free.
    x2d = x.reshape(B * S, D)

    # ---- generation-aware VMEM budget & batch-tile selection ----
    try:
        vmem_cap = int(pltpu.get_tpu_info().vmem_capacity_bytes)
    except Exception:
        vmem_cap = 64 * 1024 * 1024          # v7x-safe fallback
    vmem_budget = int(vmem_cap * 0.7)        # headroom for Mosaic internal scratch

    def footprint(bt):
        rows = bt * S
        xb = 2 * rows * D * 4                                  # x block, double-buffered
        ob = 2 * rows * D * 4                                  # out block, double-buffered
        wb = 2 * (3 * D * D * mm_itemsize + 3 * D * 4)         # weights + biases
        qkv = rows * D * (4 + mm_itemsize) * 3                 # q/k/v f32 + casts
        sc = 3 * S * S * 4 + S * S * mm_itemsize               # per-batch scores/e/attn
        return xb + ob + wb + qkv + sc + S * D * 4

    if batch_tile is None:
        # ~512 projection rows per grid step fills the MXU M dim nicely while
        # keeping per-step overhead (~0.35 us) negligible.
        batch_tile = max(1, min(B, 512 // max(S, 1)))
    if B >= 2:
        # Keep >= 2 grid steps so both v7x TensorCores get work.
        batch_tile = min(batch_tile, max(1, B // 2))
    batch_tile = max(1, min(batch_tile, B))
    while batch_tile > 1 and footprint(batch_tile) > vmem_budget:
        batch_tile -= 1
    # Respect the (8, 128) sublane constraint for non-full blocks.
    if (batch_tile * S) % 8 != 0 and batch_tile != B:
        batch_tile = B

    grid = (pl.cdiv(B, batch_tile),)
    vmem_limit = int(min(int(vmem_cap * 0.9),
                         max(2 * footprint(batch_tile), 16 * 1024 * 1024)))

    kernel = functools.partial(
        _self_attention_kernel, batch_tile=batch_tile, seq_len=S, input_dim=D,
        matmul_dtype=matmul_dtype, approx_reciprocal=approx_reciprocal)

    const = lambda i: (0, 0)   # weight/bias blocks: fetched once, never re-DMA'd

    out2d = pl.pallas_call(
        kernel,
        out_shape=jax.ShapeDtypeStruct((B * S, D), x.dtype),
        grid=grid,
        in_specs=[
            pl.BlockSpec((batch_tile * S, D), lambda i: (i, 0)),   # x rows
            pl.BlockSpec((D, D), const),                           # Wq^T (scaled)
            pl.BlockSpec((D, D), const),                           # Wk^T
            pl.BlockSpec((D, D), const),                           # Wv^T
            pl.BlockSpec((1, D), const),                           # bq (scaled)
            pl.BlockSpec((1, D), const),                           # bk
            pl.BlockSpec((1, D), const),                           # bv
        ],
        out_specs=pl.BlockSpec((batch_tile * S, D), lambda i: (i, 0)),
        compiler_params=pltpu.CompilerParams(
            dimension_semantics=("parallel",),
            vmem_limit_bytes=vmem_limit),
    )(x2d, wq_t, wk_t, wv_t, bq_r, bk_r, bv_r)

    return out2d.reshape(B, S, D)


def self_attention_ref(x, wq, bq, wk, bk, wv, bv):
    """Pure-JAX high-precision reference matching the PyTorch module semantics."""
    hp = jax.lax.Precision.HIGHEST
    q = jnp.einsum("bsd,ed->bse", x, wq, precision=hp) + bq
    k = jnp.einsum("bsd,ed->bse", x, wk, precision=hp) + bk
    v = jnp.einsum("bsd,ed->bse", x, wv, precision=hp) + bv
    scores = jnp.einsum("bqe,bke->bqk", q, k, precision=hp) / (x.shape[-1] ** 0.5)
    attn = jax.nn.softmax(scores, axis=2)
    return jnp.einsum("bqk,bke->bqe", attn, v, precision=hp)


if __name__ == "__main__":
    B, S, D = 2, 8, 32   # input_dim = 32

    key = jax.random.PRNGKey(0)
    kx, kwq, kbq, kwk, kbk, kwv, kbv = jax.random.split(key, 7)

    x = jax.random.normal(kx, (B, S, D), dtype=jnp.float32)

    # Deterministic parameter init mimicking nn.Linear's U(-1/sqrt(D), 1/sqrt(D)).
    bound = 1.0 / (D ** 0.5)
    wq = jax.random.uniform(kwq, (D, D), jnp.float32, -bound, bound)
    bq = jax.random.uniform(kbq, (D,), jnp.float32, -bound, bound)
    wk = jax.random.uniform(kwk, (D, D), jnp.float32, -bound, bound)
    bk = jax.random.uniform(kbk, (D,), jnp.float32, -bound, bound)
    wv = jax.random.uniform(kwv, (D, D), jnp.float32, -bound, bound)
    bv = jax.random.uniform(kbv, (D,), jnp.float32, -bound, bound)

    # Fast path: bf16 MXU inputs, f32 accumulation/softmax, approx reciprocal.
    out_bf16 = self_attention(x, wq, bq, wk, bk, wv, bv)
    # Correctness-only path: f32 matmul dtype, exact softmax division.
    out_f32 = self_attention(x, wq, bq, wk, bk, wv, bv,
                             matmul_dtype=jnp.float32, approx_reciprocal=False)
    out_bf16, out_f32 = jax.block_until_ready((out_bf16, out_f32))

    ref = self_attention_ref(x, wq, bq, wk, bk, wv, bv)
    assert out_bf16.shape == (B, S, D)
    assert out_f32.shape == (B, S, D)
    assert jnp.allclose(out_f32, ref, atol=2e-2, rtol=2e-2), \
        f"f32 max err {jnp.max(jnp.abs(out_f32 - ref))}"
    assert jnp.allclose(out_bf16, ref, atol=5e-2, rtol=5e-2), \
        f"bf16 max err {jnp.max(jnp.abs(out_bf16 - ref))}"

    print("KERNEL_OK")
</pallas_src>

<mosaic_0001>
module attributes {stable_mosaic.version = 11 : i64} {
  func.func @_self_attention_kernel(%arg0: i32, %arg1: memref<8x32xf32, #tpu.memory_space<vmem>>, %arg2: memref<32x32xbf16, #tpu.memory_space<vmem>>, %arg3: memref<32x32xbf16, #tpu.memory_space<vmem>>, %arg4: memref<32x32xbf16, #tpu.memory_space<vmem>>, %arg5: memref<1x32xf32, #tpu.memory_space<vmem>>, %arg6: memref<1x32xf32, #tpu.memory_space<vmem>>, %arg7: memref<1x32xf32, #tpu.memory_space<vmem>>, %arg8: memref<8x32xf32, #tpu.memory_space<vmem>>) attributes {dimension_semantics = [#tpu.dimension_semantics<parallel>], iteration_bounds = array<i64: 2>, scalar_prefetch = 0 : i64, scratch_operands = 0 : i64, tpu.core_type = #tpu.core_type<tc>, window_params = [{transform_indices = @transform_0, window_bounds = array<i64: 8, 32>}, {pipeline_mode = #tpu.pipeline_mode<synchronous>, transform_indices = @transform_1, window_bounds = array<i64: 32, 32>}, {pipeline_mode = #tpu.pipeline_mode<synchronous>, transform_indices = @transform_2, window_bounds = array<i64: 32, 32>}, {pipeline_mode = #tpu.pipeline_mode<synchronous>, transform_indices = @transform_3, window_bounds = array<i64: 32, 32>}, {pipeline_mode = #tpu.pipeline_mode<synchronous>, transform_indices = @transform_4, window_bounds = array<i64: 1, 32>}, {pipeline_mode = #tpu.pipeline_mode<synchronous>, transform_indices = @transform_5, window_bounds = array<i64: 1, 32>}, {pipeline_mode = #tpu.pipeline_mode<synchronous>, transform_indices = @transform_6, window_bounds = array<i64: 1, 32>}, {transform_indices = @transform_7, window_bounds = array<i64: 8, 32>}]} {
    %c0 = arith.constant 0 : index
    %c0_0 = arith.constant 0 : index
    %0 = vector.load %arg1[%c0, %c0_0] : memref<8x32xf32, #tpu.memory_space<vmem>>, vector<8x32xf32>
    %1 = arith.truncf %0 : vector<8x32xf32> to vector<8x32xbf16>
    %c0_1 = arith.constant 0 : index
    %c0_2 = arith.constant 0 : index
    %2 = vector.load %arg2[%c0_1, %c0_2] : memref<32x32xbf16, #tpu.memory_space<vmem>>, vector<32x32xbf16>
    %cst = arith.constant dense<0.000000e+00> : vector<8x32xf32>
    %3 = tpu.matmul %1, %2, %cst {dimension_numbers = #tpu.dot_dimension_numbers<[1], [0], [0], [1], [0, 0, 1, 1], [], []>} : vector<8x32xbf16>, vector<32x32xbf16>, vector<8x32xf32> -> vector<8x32xf32>
    %c0_3 = arith.constant 0 : index
    %c0_4 = arith.constant 0 : index
    %4 = vector.load %arg5[%c0_3, %c0_4] : memref<1x32xf32, #tpu.memory_space<vmem>>, vector<1x32xf32>
    %5 = vector.broadcast %4 : vector<1x32xf32> to vector<8x32xf32>
    %6 = arith.addf %3, %5 : vector<8x32xf32>
    %c0_5 = arith.constant 0 : index
    %c0_6 = arith.constant 0 : index
    %7 = vector.load %arg3[%c0_5, %c0_6] : memref<32x32xbf16, #tpu.memory_space<vmem>>, vector<32x32xbf16>
    %cst_7 = arith.constant dense<0.000000e+00> : vector<8x32xf32>
    %8 = tpu.matmul %1, %7, %cst_7 {dimension_numbers = #tpu.dot_dimension_numbers<[1], [0], [0], [1], [0, 0, 1, 1], [], []>} : vector<8x32xbf16>, vector<32x32xbf16>, vector<8x32xf32> -> vector<8x32xf32>
    %c0_8 = arith.constant 0 : index
    %c0_9 = arith.constant 0 : index
    %9 = vector.load %arg6[%c0_8, %c0_9] : memref<1x32xf32, #tpu.memory_space<vmem>>, vector<1x32xf32>
    %10 = vector.broadcast %9 : vector<1x32xf32> to vector<8x32xf32>
    %11 = arith.addf %8, %10 : vector<8x32xf32>
    %c0_10 = arith.constant 0 : index
    %c0_11 = arith.constant 0 : index
    %12 = vector.load %arg4[%c0_10, %c0_11] : memref<32x32xbf16, #tpu.memory_space<vmem>>, vector<32x32xbf16>
    %cst_12 = arith.constant dense<0.000000e+00> : vector<8x32xf32>
    %13 = tpu.matmul %1, %12, %cst_12 {dimension_numbers = #tpu.dot_dimension_numbers<[1], [0], [0], [1], [0, 0, 1, 1], [], []>} : vector<8x32xbf16>, vector<32x32xbf16>, vector<8x32xf32> -> vector<8x32xf32>
    %c0_13 = arith.constant 0 : index
    %c0_14 = arith.constant 0 : index
    %14 = vector.load %arg7[%c0_13, %c0_14] : memref<1x32xf32, #tpu.memory_space<vmem>>, vector<1x32xf32>
    %15 = vector.broadcast %14 : vector<1x32xf32> to vector<8x32xf32>
    %16 = arith.addf %13, %15 : vector<8x32xf32>
    %17 = arith.truncf %6 : vector<8x32xf32> to vector<8x32xbf16>
    %18 = arith.truncf %11 : vector<8x32xf32> to vector<8x32xbf16>
    %19 = arith.truncf %16 : vector<8x32xf32> to vector<8x32xbf16>
    %cst_15 = arith.constant dense<0.000000e+00> : vector<8x8xf32>
    %20 = tpu.matmul %17, %18, %cst_15 {dimension_numbers = #tpu.dot_dimension_numbers<[1], [1], [0], [0], [0, 0, 1, 0], [], []>} : vector<8x32xbf16>, vector<8x32xbf16>, vector<8x8xf32> -> vector<8x8xf32>
    %cst_16 = arith.constant dense<0xFF800000> : vector<8xf32>
    %21 = vector.multi_reduction <maximumf>, %20, %cst_16 [1] : vector<8x8xf32> to vector<8xf32>
    %22 = vector.shape_cast %21 : vector<8xf32> to vector<8x1xf32>
    %23 = vector.broadcast %22 : vector<8x1xf32> to vector<8x8xf32>
    %24 = arith.subf %20, %23 : vector<8x8xf32>
    %25 = math.exp %24 : vector<8x8xf32>
    %cst_17 = arith.constant dense<0.000000e+00> : vector<8xf32>
    %26 = vector.multi_reduction <add>, %25, %cst_17 [1] : vector<8x8xf32> to vector<8xf32>
    %27 = vector.shape_cast %26 : vector<8xf32> to vector<8x1xf32>
    %28 = tpu.reciprocal %27 {approx = true} : vector<8x1xf32> -> vector<8x1xf32>
    %29 = vector.broadcast %28 : vector<8x1xf32> to vector<8x8xf32>
    %30 = arith.mulf %25, %29 : vector<8x8xf32>
    %31 = arith.truncf %30 : vector<8x8xf32> to vector<8x8xbf16>
    %cst_18 = arith.constant dense<0.000000e+00> : vector<8x32xf32>
    %32 = tpu.matmul %31, %19, %cst_18 {dimension_numbers = #tpu.dot_dimension_numbers<[1], [0], [0], [1], [0, 0, 1, 1], [], []>} : vector<8x8xbf16>, vector<8x32xbf16>, vector<8x32xf32> -> vector<8x32xf32>
    %c0_19 = arith.constant 0 : index
    %c0_20 = arith.constant 0 : index
    %33 = vector.load %arg8[%c0_19, %c0_20] : memref<8x32xf32, #tpu.memory_space<vmem>>, vector<8x32xf32>
    tpu.vector_store %arg8[%c0_19, %c0_20], %32 {strides = array<i32>} : memref<8x32xf32, #tpu.memory_space<vmem>>, vector<8x32xf32>,
    return
  }
  func.func @transform_0(%arg0: i32) -> (i32, i32) {
    %c0_i32 = arith.constant 0 : i32
    %c0_i32_0 = arith.constant 0 : i32
    return %arg0, %c0_i32 : i32, i32
  }
  func.func @transform_1(%arg0: i32) -> (i32, i32) {
    %c0_i32 = arith.constant 0 : i32
    %c0_i32_0 = arith.constant 0 : i32
    %c0_i32_1 = arith.constant 0 : i32
    return %c0_i32, %c0_i32_0 : i32, i32
  }
  func.func @transform_2(%arg0: i32) -> (i32, i32) {
    %c0_i32 = arith.constant 0 : i32
    %c0_i32_0 = arith.constant 0 : i32
    %c0_i32_1 = arith.constant 0 : i32
    return %c0_i32, %c0_i32_0 : i32, i32
  }
  func.func @transform_3(%arg0: i32) -> (i32, i32) {
    %c0_i32 = arith.constant 0 : i32
    %c0_i32_0 = arith.constant 0 : i32
    %c0_i32_1 = arith.constant 0 : i32
    return %c0_i32, %c0_i32_0 : i32, i32
  }
  func.func @transform_4(%arg0: i32) -> (i32, i32) {
    %c0_i32 = arith.constant 0 : i32
    %c0_i32_0 = arith.constant 0 : i32
    %c0_i32_1 = arith.constant 0 : i32
    return %c0_i32, %c0_i32_0 : i32, i32
  }
  func.func @transform_5(%arg0: i32) -> (i32, i32) {
    %c0_i32 = arith.constant 0 : i32
    %c0_i32_0 = arith.constant 0 : i32
    %c0_i32_1 = arith.constant 0 : i32
    return %c0_i32, %c0_i32_0 : i32, i32
  }
  func.func @transform_6(%arg0: i32) -> (i32, i32) {
    %c0_i32 = arith.constant 0 : i32
    %c0_i32_0 = arith.constant 0 : i32
    %c0_i32_1 = arith.constant 0 : i32
    return %c0_i32, %c0_i32_0 : i32, i32
  }
  func.func @transform_7(%arg0: i32) -> (i32, i32) {
    %c0_i32 = arith.constant 0 : i32
    %c0_i32_0 = arith.constant 0 : i32
    return %arg0, %c0_i32 : i32, i32
  }
}

</mosaic_0001>

<llo_original>
// kernel: tpu_custom_call.1
$region0: #{tpu_custom_call.1}
  #allocation0 [shape = 'u32[]', space=smem, size = 0x4, offset = 0x4, fixed_abs, tag = 'smem constant byte address 0x4 - core index']
  #allocation1 [shape = 'u32[144,128]{1,0:T(1,128)}', space=vmem, size = 0x12000, scoped, tag = 'internal scratch']
  %s0 = inlined_call_operand.hbm [shape: f32[16,32], index: 0, kind: input, shape index: {}]
  %s1 = inlined_call_operand.hbm [shape: bf16[32,32], index: 1, kind: input, shape index: {}]
  %s2 = inlined_call_operand.hbm [shape: bf16[32,32], index: 2, kind: input, shape index: {}]
  %s3 = inlined_call_operand.hbm [shape: bf16[32,32], index: 3, kind: input, shape index: {}]
  %s4 = inlined_call_operand.vmem [shape: f32[1,32], index: 4, kind: input, shape index: {}]
  %s5 = inlined_call_operand.vmem [shape: f32[1,32], index: 5, kind: input, shape index: {}]
  %s6 = inlined_call_operand.vmem [shape: f32[1,32], index: 6, kind: input, shape index: {}]
  %s7 = inlined_call_operand.hbm [shape: f32[16,32], index: 7, kind: output, shape index: {}]
  %s8 = sld [smem:[#allocation0]]
  $region77: #{tpu_custom_call.1} parent=0
    _
  %s10 = ssub.s32 1, %s8
  %s11 = scalar_select 0, %s10, %s8
  $region1: #{tpu_custom_call.1} parent=0
    #allocation2 [shape = 'u8[8192]{0}', space=vmem, size = 0x2000, scoped, tag = 'input window, operand 0']
    #allocation3 [shape = 's32[2]{0}', space=sflag, size = 0x8, scoped, tag = 'scoped memory for tpu_custom_call.1']
    #allocation4 [shape = 's32[2]{0}', space=sflag, size = 0x8, scoped, tag = 'scoped memory for tpu_custom_call.1']
    #allocation5 [shape = 'u8[8192]{0}', space=vmem, size = 0x2000, scoped, tag = 'input window, operand 1, single buffered']
    #allocation6 [shape = 's32[1]{0}', space=sflag, size = 0x4, scoped, tag = 'scoped memory for tpu_custom_call.1']
    #allocation7 [shape = 'u8[8192]{0}', space=vmem, size = 0x2000, scoped, tag = 'input window, operand 2, single buffered']
    #allocation8 [shape = 'u8[8192]{0}', space=vmem, size = 0x2000, scoped, tag = 'input window, operand 3, single buffered']
    #allocation9 [shape = 's32[1]{0}', space=sflag, size = 0x4, scoped, tag = 'scoped memory for tpu_custom_call.1']
    #allocation10 [shape = 'u8[8192]{0}', space=vmem, size = 0x2000, scoped, tag = 'output window, operand 0']
    %12 = vsyncpa [#allocation3], 0
    %s13 = scalar_lea.sflag [#allocation3], 1
    %14 = vsyncpa %s13, 0
    %15 = vsyncpa [#allocation6], 0
    %16 = vsyncpa [#allocation9], 0
    %17 = vsyncpa [#allocation4], 0
    %s18 = scalar_lea.sflag [#allocation4], 1
    %19 = vsyncpa %s18, 0
    loop: start=0, step=1, limit=4
    $region2: #{tpu_custom_call.1} parent=1 // loop_pre_header
      _
    $region3: #{tpu_custom_call.1} parent=1 // loop_header
      %s21 = sphi 0, %s25
      %p22 = scmp.ge.s32.totalorder %s21, 4
      %s31 = sphi 0, %s33
      %s34 = sphi 0, %s31
      %s35 = sphi 0, %s34
      %s51 = sphi 0, %s35
      %s55 = sphi 0, %s55
      %s57 = sphi 0, %s55
      %s58 = sphi 0, %s57
      %s72 = sphi 0, %s58
      %s76 = sphi 0, %s76
      %s78 = sphi 0, %s76
      %s79 = sphi 0, %s78
      %s93 = sphi 0, %s79
      %s97 = sphi 0, %s97
      %s99 = sphi 0, %s97
      %s100 = sphi 0, %s99
      %s114 = sphi 0, %s100
      %s118 = sphi 0, %s118
      %s120 = sphi 0, %s118
      %s121 = sphi 0, %s120
      %s135 = sphi 0, %s121
      %s139 = sphi 0, %s139
      %s141 = sphi 0, %s139
      %s142 = sphi 0, %s141
      %s156 = sphi 0, %s142
      %s160 = sphi 0, %s160
      %s162 = sphi 0, %s160
      %s163 = sphi 0, %s162
      %s177 = sphi 0, %s163
      %s183 = sphi 0, %s185
      %s186 = sphi 0, %s183
      %s187 = sphi 0, %s186
      %s203 = sphi 0, %s187
    $region4: #{tpu_custom_call.1} parent=1 // loop_header_branch
      %24 = sbr.rel (%p22) target = $region8
    $region5: #{tpu_custom_call.1} parent=1 // loop_body
      %s26 = ssub.s32 %s21, 1
      %s27 = ssub.s32 %s21, 2
      %s28 = sadd.s32 %s21, 1
      %s29 = ssub.s32 %s21, %s28
      %p30 = scmp.eq.s32.totalorder %s29, 0
      %s32 = sadd.s32 %s31, 1
      %s33 = scalar_select %p30, %s31, %s32
      %p36 = pneg %p30
      %p37 = scmp.eq.s32.totalorder %s21, 1
      %p38 = por %p36, %p37
      %p39 = scmp.ne.s32.totalorder %s31, %s34
      %p40 = scmp.eq.s32.totalorder %s21, 0
      %p41 = por %p39, %p40
      %p42 = scmp.ne.s32.totalorder %s31, %s34
      %p43 = scmp.eq.s32.totalorder %s26, 1
      %p44 = por %p42, %p43
      %p45 = scmp.ne.s32.totalorder %s34, %s35
      %p46 = scmp.eq.s32.totalorder %s26, 0
      %p47 = por %p45, %p46
      %p48 = scmp.ne.s32.totalorder %s34, %s35
      %p49 = scmp.eq.s32.totalorder %s27, 1
      %p50 = por %p48, %p49
      %p52 = scmp.ne.s32.totalorder %s35, %s51
      %p53 = scmp.eq.s32.totalorder %s27, 0
      %p54 = por %p52, %p53
      %s56 = sadd.s32 %s55, 1
      %p59 = scmp.eq.s32.totalorder %s21, 1
      %p60 = scmp.ne.s32.totalorder %s55, %s57
      %p61 = scmp.eq.s32.totalorder %s21, 0
      %p62 = por %p60, %p61
      %p63 = scmp.ne.s32.totalorder %s55, %s57
      %p64 = scmp.eq.s32.totalorder %s26, 1
      %p65 = por %p63, %p64
      %p66 = scmp.ne.s32.totalorder %s57, %s58
      %p67 = scmp.eq.s32.totalorder %s26, 0
      %p68 = por %p66, %p67
      %p69 = scmp.ne.s32.totalorder %s57, %s58
      %p70 = scmp.eq.s32.totalorder %s27, 1
      %p71 = por %p69, %p70
      %p73 = scmp.ne.s32.totalorder %s58, %s72
      %p74 = scmp.eq.s32.totalorder %s27, 0
      %p75 = por %p73, %p74
      %s77 = sadd.s32 %s76, 1
      %p80 = scmp.eq.s32.totalorder %s21, 1
      %p81 = scmp.ne.s32.totalorder %s76, %s78
      %p82 = scmp.eq.s32.totalorder %s21, 0
      %p83 = por %p81, %p82
      %p84 = scmp.ne.s32.totalorder %s76, %s78
      %p85 = scmp.eq.s32.totalorder %s26, 1
      %p86 = por %p84, %p85
      %p87 = scmp.ne.s32.totalorder %s78, %s79
      %p88 = scmp.eq.s32.totalorder %s26, 0
      %p89 = por %p87, %p88
      %p90 = scmp.ne.s32.totalorder %s78, %s79
      %p91 = scmp.eq.s32.totalorder %s27, 1
      %p92 = por %p90, %p91
      %p94 = scmp.ne.s32.totalorder %s79, %s93
      %p95 = scmp.eq.s32.totalorder %s27, 0
      %p96 = por %p94, %p95
      %s98 = sadd.s32 %s97, 1
      %p101 = scmp.eq.s32.totalorder %s21, 1
      %p102 = scmp.ne.s32.totalorder %s97, %s99
      %p103 = scmp.eq.s32.totalorder %s21, 0
      %p104 = por %p102, %p103
      %p105 = scmp.ne.s32.totalorder %s97, %s99
      %p106 = scmp.eq.s32.totalorder %s26, 1
      %p107 = por %p105, %p106
      %p108 = scmp.ne.s32.totalorder %s99, %s100
      %p109 = scmp.eq.s32.totalorder %s26, 0
      %p110 = por %p108, %p109
      %p111 = scmp.ne.s32.totalorder %s99, %s100
      %p112 = scmp.eq.s32.totalorder %s27, 1
      %p113 = por %p111, %p112
      %p115 = scmp.ne.s32.totalorder %s100, %s114
      %p116 = scmp.eq.s32.totalorder %s27, 0
      %p117 = por %p115, %p116
      %s119 = sadd.s32 %s118, 1
      %p122 = scmp.eq.s32.totalorder %s21, 1
      %p123 = scmp.ne.s32.totalorder %s118, %s120
      %p124 = scmp.eq.s32.totalorder %s21, 0
      %p125 = por %p123, %p124
      %p126 = scmp.ne.s32.totalorder %s118, %s120
      %p127 = scmp.eq.s32.totalorder %s26, 1
      %p128 = por %p126, %p127
      %p129 = scmp.ne.s32.totalorder %s120, %s121
      %p130 = scmp.eq.s32.totalorder %s26, 0
      %p131 = por %p129, %p130
      %p132 = scmp.ne.s32.totalorder %s120, %s121
      %p133 = scmp.eq.s32.totalorder %s27, 1
      %p134 = por %p132, %p133
      %p136 = scmp.ne.s32.totalorder %s121, %s135
      %p137 = scmp.eq.s32.totalorder %s27, 0
      %p138 = por %p136, %p137
      %s140 = sadd.s32 %s139, 1
      %p143 = scmp.eq.s32.totalorder %s21, 1
      %p144 = scmp.ne.s32.totalorder %s139, %s141
      %p145 = scmp.eq.s32.totalorder %s21, 0
      %p146 = por %p144, %p145
      %p147 = scmp.ne.s32.totalorder %s139, %s141
      %p148 = scmp.eq.s32.totalorder %s26, 1
      %p149 = por %p147, %p148
      %p150 = scmp.ne.s32.totalorder %s141, %s142
      %p151 = scmp.eq.s32.totalorder %s26, 0
      %p152 = por %p150, %p151
      %p153 = scmp.ne.s32.totalorder %s141, %s142
      %p154 = scmp.eq.s32.totalorder %s27, 1
      %p155 = por %p153, %p154
      %p157 = scmp.ne.s32.totalorder %s142, %s156
      %p158 = scmp.eq.s32.totalorder %s27, 0
      %p159 = por %p157, %p158
      %s161 = sadd.s32 %s160, 1
      %p164 = scmp.eq.s32.totalorder %s21, 1
      %p165 = scmp.ne.s32.totalorder %s160, %s162
      %p166 = scmp.eq.s32.totalorder %s21, 0
      %p167 = por %p165, %p166
      %p168 = scmp.ne.s32.totalorder %s160, %s162
      %p169 = scmp.eq.s32.totalorder %s26, 1
      %p170 = por %p168, %p169
      %p171 = scmp.ne.s32.totalorder %s162, %s163
      %p172 = scmp.eq.s32.totalorder %s26, 0
      %p173 = por %p171, %p172
      %p174 = scmp.ne.s32.totalorder %s162, %s163
      %p175 = scmp.eq.s32.totalorder %s27, 1
      %p176 = por %p174, %p175
      %p178 = scmp.ne.s32.totalorder %s163, %s177
      %p179 = scmp.eq.s32.totalorder %s27, 0
      %p180 = por %p178, %p179
      %s181 = ssub.s32 %s21, %s28
      %p182 = scmp.eq.s32.totalorder %s181, 0
      %s184 = sadd.s32 %s183, 1
      %s185 = scalar_select %p182, %s183, %s184
      %p188 = pneg %p182
      %p189 = scmp.eq.s32.totalorder %s21, 1
      %p190 = por %p188, %p189
      %p191 = scmp.ne.s32.totalorder %s183, %s186
      %p192 = scmp.eq.s32.totalorder %s21, 0
      %p193 = por %p191, %p192
      %p194 = scmp.ne.s32.totalorder %s183, %s186
      %p195 = scmp.eq.s32.totalorder %s26, 1
      %p196 = por %p194, %p195
      %p197 = scmp.ne.s32.totalorder %s186, %s187
      %p198 = scmp.eq.s32.totalorder %s26, 0
      %p199 = por %p197, %p198
      %p200 = scmp.ne.s32.totalorder %s186, %s187
      %p201 = scmp.eq.s32.totalorder %s27, 1
      %p202 = por %p200, %p201
      %p204 = scmp.ne.s32.totalorder %s187, %s203
      %p205 = scmp.eq.s32.totalorder %s27, 0
      %p206 = por %p204, %p205
      %p207 = scmp.le.s32.totalorder 1, %s21
      %p208 = scmp.lt.s32.totalorder %s21, 3
      %p209 = pnand %p207, %p208
      %p210 = pneg %p209
      // Predicated region
      $region9: #{tpu_custom_call.1} parent=5 // pred_check
        _
      $region10: #{tpu_custom_call.1} parent=5 // pred_check_branch
        %212 = sbr.rel (%p209) target = $region12
      $region11: #{tpu_custom_call.1} parent=5 // pred_region
        %s213 = ssub.s32 %s21, 1
        // Predicated region
        $region13: #{tpu_custom_call.1} parent=11 // pred_check
          %p214 = pneg %p68
        $region14: #{tpu_custom_call.1} parent=11 // pred_check_branch
          %216 = sbr.rel (%p214) target = $region16
        $region15: #{tpu_custom_call.1} parent=11 // pred_region
          %s218 = ssub.s32 256, 256
          %219 = vsyncadd [#allocation6], %s218
          %s220 = sshll.u32 [#allocation5], 4
          %s221 = int_to_ptr.vmem [resolvable:$true] %s220
          %226 = dma.hbm_to_vmem [thread:$0]  %s1, 256, %s221, [#allocation6], 64, 64, 4
        $region16: #{tpu_custom_call.1} parent=11 // pred_fallthru
          _
        // Predicated region
        $region17: #{tpu_custom_call.1} parent=11 // pred_check
          %p227 = pneg %p89
        $region18: #{tpu_custom_call.1} parent=11 // pred_check_branch
          %229 = sbr.rel (%p227) target = $region20
        $region19: #{tpu_custom_call.1} parent=11 // pred_region
          %s231 = ssub.s32 256, 256
          %232 = vsyncadd [#allocation6], %s231
          %s233 = sshll.u32 [#allocation7], 4
          %s234 = int_to_ptr.vmem [resolvable:$true] %s233
          %239 = dma.hbm_to_vmem [thread:$0]  %s2, 256, %s234, [#allocation6], 64, 64, 4
        $region20: #{tpu_custom_call.1} parent=11 // pred_fallthru
          _
        // Predicated region
        $region21: #{tpu_custom_call.1} parent=11 // pred_check
          %p240 = pneg %p110
        $region22: #{tpu_custom_call.1} parent=11 // pred_check_branch
          %242 = sbr.rel (%p240) target = $region24
        $region23: #{tpu_custom_call.1} parent=11 // pred_region
          %s244 = ssub.s32 256, 256
          %245 = vsyncadd [#allocation9], %s244
          %s246 = sshll.u32 [#allocation8], 4
          %s247 = int_to_ptr.vmem [resolvable:$true] %s246
          %252 = dma.hbm_to_vmem [thread:$0]  %s3, 256, %s247, [#allocation9], 64, 64, 4
        $region24: #{tpu_custom_call.1} parent=11 // pred_fallthru
          _
        // Predicated region
        $region25: #{tpu_custom_call.1} parent=11 // pred_check
          %p253 = pneg %p131
        $region26: #{tpu_custom_call.1} parent=11 // pred_check_branch
          %255 = sbr.rel (%p253) target = $region28
        $region27: #{tpu_custom_call.1} parent=11 // pred_region
          _
        $region28: #{tpu_custom_call.1} parent=11 // pred_fallthru
          _
        // Predicated region
        $region29: #{tpu_custom_call.1} parent=11 // pred_check
          %p256 = pneg %p152
        $region30: #{tpu_custom_call.1} parent=11 // pred_check_branch
          %258 = sbr.rel (%p256) target = $region32
        $region31: #{tpu_custom_call.1} parent=11 // pred_region
          _
        $region32: #{tpu_custom_call.1} parent=11 // pred_fallthru
          _
        // Predicated region
        $region33: #{tpu_custom_call.1} parent=11 // pred_check
          %p259 = pneg %p173
        $region34: #{tpu_custom_call.1} parent=11 // pred_check_branch
          %261 = sbr.rel (%p259) target = $region36
        $region35: #{tpu_custom_call.1} parent=11 // pred_region
          _
        $region36: #{tpu_custom_call.1} parent=11 // pred_fallthru
          _
      $region12: #{tpu_custom_call.1} parent=5 // pred_fallthru
        _
      %p262 = scmp.lt.s32.totalorder %s21, 2
      // Predicated region
      $region37: #{tpu_custom_call.1} parent=5 // pred_check
        %p263 = pneg %p262
      $region38: #{tpu_custom_call.1} parent=5 // pred_check_branch
        %265 = sbr.rel (%p263) target = $region40
      $region39: #{tpu_custom_call.1} parent=5 // pred_region
        // Predicated region
        $region41: #{tpu_custom_call.1} parent=39 // pred_check
          %p266 = pneg %p41
        $region42: #{tpu_custom_call.1} parent=39 // pred_check_branch
          %268 = sbr.rel (%p266) target = $region44
        $region43: #{tpu_custom_call.1} parent=39 // pred_region
          %s269 = sand.u32 %s31, 1
          %s270 = scalar_lea.sflag [#allocation3], %s269
          %s271 = sand.u32 %s31, 1
          %s272 = smul.addr %s271, 8
          %s273 = scalar_lea.vmem [#allocation2], %s272
          %s275 = ssub.s32 128, 128
          %276 = vsyncadd %s270, %s275
          %s277 = smul.addr %s21, 128
          %s278 = scalar_lea.hbm %s0, %s277
          %s280 = sshll.u32 %s273, 4
          %s281 = int_to_ptr.vmem [resolvable:$true] %s280
          %283 = dma.hbm_to_vmem [thread:$0]  %s278, 128, %s281, %s270
        $region44: #{tpu_custom_call.1} parent=39 // pred_fallthru
          _
      $region40: #{tpu_custom_call.1} parent=5 // pred_fallthru
        _
      %p284 = scmp.le.s32.totalorder 1, %s21
      %p285 = scmp.lt.s32.totalorder %s21, 3
      %p286 = pnand %p284, %p285
      %p287 = pneg %p286
      // Predicated region
      $region45: #{tpu_custom_call.1} parent=5 // pred_check
        _
      $region46: #{tpu_custom_call.1} parent=5 // pred_check_branch
        %289 = sbr.rel (%p286) target = $region48
      $region47: #{tpu_custom_call.1} parent=5 // pred_region
        %s290 = ssub.s32 %s21, 1
        %s291 = sand.u32 %s34, 1
        %s292 = scalar_lea.sflag [#allocation3], %s291
        %s293 = sand.u32 %s34, 1
        %s294 = smul.addr %s293, 8
        %s295 = scalar_lea.vmem [#allocation2], %s294
        // Predicated region
        $region49: #{tpu_custom_call.1} parent=47 // pred_check
          %p296 = pneg %p47
        $region50: #{tpu_custom_call.1} parent=47 // pred_check_branch
          %298 = sbr.rel (%p296) target = $region52
        $region51: #{tpu_custom_call.1} parent=47 // pred_region
          %299 = dma.done %s292, 128
        $region52: #{tpu_custom_call.1} parent=47 // pred_fallthru
          _
        // Predicated region
        $region53: #{tpu_custom_call.1} parent=47 // pred_check
          %p300 = pneg %p68
        $region54: #{tpu_custom_call.1} parent=47 // pred_check_branch
          %302 = sbr.rel (%p300) target = $region56
        $region55: #{tpu_custom_call.1} parent=47 // pred_region
          %303 = dma.done [#allocation6], 256
        $region56: #{tpu_custom_call.1} parent=47 // pred_fallthru
          _
        // Predicated region
        $region57: #{tpu_custom_call.1} parent=47 // pred_check
          %p304 = pneg %p89
        $region58: #{tpu_custom_call.1} parent=47 // pred_check_branch
          %306 = sbr.rel (%p304) target = $region60
        $region59: #{tpu_custom_call.1} parent=47 // pred_region
          %307 = dma.done [#allocation6], 256
        $region60: #{tpu_custom_call.1} parent=47 // pred_fallthru
          _
        // Predicated region
        $region61: #{tpu_custom_call.1} parent=47 // pred_check
          %p308 = pneg %p110
        $region62: #{tpu_custom_call.1} parent=47 // pred_check_branch
          %310 = sbr.rel (%p308) target = $region64
        $region63: #{tpu_custom_call.1} parent=47 // pred_region
          %311 = dma.done [#allocation9], 256
        $region64: #{tpu_custom_call.1} parent=47 // pred_fallthru
          _
        %s312 = sand.u32 %s34, 1
        %s313 = scalar_lea.sflag [#allocation3], %s312
        %s314 = sand.u32 %s34, 1
        %s315 = smul.addr %s314, 8
        %s316 = scalar_lea.vmem [#allocation2], %s315
        %p317 = pneg %p47
        %p318 = pneg %p44
        %p319 = pneg %p68
        %p320 = pneg %p65
        %p321 = pneg %p89
        %p322 = pneg %p86
        %p323 = pneg %p110
        %p324 = pneg %p107
        %p325 = pneg %p131
        %p326 = pneg %p128
        %p327 = pneg %p152
        %p328 = pneg %p149
        %p329 = pneg %p173
        %p330 = pneg %p170
        %p331 = pneg %p199
        %p332 = pneg %p196
        %s333 = sand.u32 %s186, 1
        %s334 = scalar_lea.sflag [#allocation4], %s333
        %s335 = sand.u32 %s186, 1
        %s336 = smul.addr %s335, 8
        %s337 = scalar_lea.vmem [#allocation10], %s336
        %v339 = vld [vmem:[%s295] sm:$0xff]
        %v340 = vpack.c.bf16 %v339, %v339
        %v341 = vld [vmem:[#allocation5] sm:$0xf]
        %v342 = vld [vmem:[#allocation5 + $0x4] sm:$0xf]
        %v343 = vld [vmem:[#allocation5 + $0x8] sm:$0xf]
        %v344 = vld [vmem:[#allocation5 + $0xc] sm:$0xf]
        %v345 = vld [vmem:[%s4] sm:$0x1]
        %v347 = vlaneseq
        %v348 = vshrl.u32 %v347, 7
        %v349 = vsub.s32 0, %v348
        %v350 = vrot.slane %v345, %v349
        %v356 = vunpack.c.l.b16 %v341
        %v357 = vunpack.c.l.b16 %v342
        %v358 = vunpack.c.l.b16 %v343
        %v359 = vunpack.c.l.b16 %v344
        %v360 = vpack.c.b16 %v357, %v356
        %v361 = vpack.c.b16 %v359, %v358
        %vm364 = vcmask 261120
        %v366 = vsel %vm364, %v340, 0
        %368 = vmatprep.subr.bf16.mxu0 0
        %369 = vmatpush1.bf16.msra.mxu0 %v360
        %370 = vmatprep.subr.bf16.mxu0 0
        %371 = vmatpush1.bf16.msra.mxu0 %v361
        %372 = vmatprep.subr.bf16.mxu0 0
        %373 = vmatpush1.bf16.msra.mxu0 0
        %374 = vmatprep.subr.bf16.mxu0 0
        %375 = vmatpush1.bf16.msra.mxu0 0
        %376 = vmatprep.subr.bf16.mxu0 0
        %377 = vmatpush1.bf16.msra.mxu0 0
        %378 = vmatprep.subr.bf16.mxu0 0
        %379 = vmatpush1.bf16.msra.mxu0 0
        %380 = vmatprep.subr.bf16.mxu0 0
        %381 = vmatpush1.bf16.msra.mxu0 0
        %382 = vmatprep.subr.bf16.mxu0 0
        %383 = vmatpush1.bf16.msra.mxu0 0
        %384 = vmatprep.subr.bf16.mxu0 0
        %385 = vmatpush1.bf16.msra.mxu0 0
        %386 = vmatprep.subr.bf16.mxu0 0
        %387 = vmatpush1.bf16.msra.mxu0 0
        %388 = vmatprep.subr.bf16.mxu0 0
        %389 = vmatpush1.bf16.msra.mxu0 0
        %390 = vmatprep.subr.bf16.mxu0 0
        %391 = vmatpush1.bf16.msra.mxu0 0
        %392 = vmatprep.subr.bf16.mxu0 0
        %393 = vmatpush1.bf16.msra.mxu0 0
        %394 = vmatprep.subr.bf16.mxu0 0
        %395 = vmatpush1.bf16.msra.mxu0 0
        %396 = vmatprep.subr.bf16.mxu0 0
        %397 = vmatpush1.bf16.msra.mxu0 0
        %398 = vmatprep.subr.bf16.mxu0 0
        %399 = vmatpush1.bf16.msra.mxu0 0
        %400 = vmatprep.mubr.bf16.mxu0 0
        %401 = vmatmul.mubr.bf16.gmra.mrb[0].mxu0 %v366
        %v402 = vpop.f32.mrb[0].mxu0
        %v403 = vadd.f32 %v350, %v402
        %v404 = vpop.f32.mrb[0].mxu0
        %v405 = vpop.f32.mrb[0].mxu0
        %v406 = vpop.f32.mrb[0].mxu0
        %407 = vdwg.mxu0
        %v408 = vld [vmem:[#allocation7] sm:$0xf]
        %v409 = vld [vmem:[#allocation7 + $0x4] sm:$0xf]
        %v410 = vld [vmem:[#allocation7 + $0x8] sm:$0xf]
        %v411 = vld [vmem:[#allocation7 + $0xc] sm:$0xf]
        %v412 = vld [vmem:[%s5] sm:$0x1]
        %v414 = vlaneseq
        %v415 = vshrl.u32 %v414, 7
        %v416 = vsub.s32 0, %v415
        %v417 = vrot.slane %v412, %v416
        %v423 = vunpack.c.l.b16 %v408
        %v424 = vunpack.c.l.b16 %v409
        %v425 = vunpack.c.l.b16 %v410
        %v426 = vunpack.c.l.b16 %v411
        %v427 = vpack.c.b16 %v424, %v423
        %v428 = vpack.c.b16 %v426, %v425
        %431 = vmatprep.subr.bf16.mxu0 0
        %432 = vmatpush1.bf16.msra.mxu0 %v427
        %433 = vmatprep.subr.bf16.mxu0 0
        %434 = vmatpush1.bf16.msra.mxu0 %v428
        %435 = vmatprep.subr.bf16.mxu0 0
        %436 = vmatpush1.bf16.msra.mxu0 0
        %437 = vmatprep.subr.bf16.mxu0 0
        %438 = vmatpush1.bf16.msra.mxu0 0
        %439 = vmatprep.subr.bf16.mxu0 0
        %440 = vmatpush1.bf16.msra.mxu0 0
        %441 = vmatprep.subr.bf16.mxu0 0
        %442 = vmatpush1.bf16.msra.mxu0 0
        %443 = vmatprep.subr.bf16.mxu0 0
        %444 = vmatpush1.bf16.msra.mxu0 0
        %445 = vmatprep.subr.bf16.mxu0 0
        %446 = vmatpush1.bf16.msra.mxu0 0
        %447 = vmatprep.subr.bf16.mxu0 0
        %448 = vmatpush1.bf16.msra.mxu0 0
        %449 = vmatprep.subr.bf16.mxu0 0
        %450 = vmatpush1.bf16.msra.mxu0 0
        %451 = vmatprep.subr.bf16.mxu0 0
        %452 = vmatpush1.bf16.msra.mxu0 0
        %453 = vmatprep.subr.bf16.mxu0 0
        %454 = vmatpush1.bf16.msra.mxu0 0
        %455 = vmatprep.subr.bf16.mxu0 0
        %456 = vmatpush1.bf16.msra.mxu0 0
        %457 = vmatprep.subr.bf16.mxu0 0
        %458 = vmatpush1.bf16.msra.mxu0 0
        %459 = vmatprep.subr.bf16.mxu0 0
        %460 = vmatpush1.bf16.msra.mxu0 0
        %461 = vmatprep.subr.bf16.mxu0 0
        %462 = vmatpush1.bf16.msra.mxu0 0
        %463 = vmatprep.mubr.bf16.mxu0 0
        %464 = vmatmul.mubr.bf16.gmra.mrb[0].mxu0 %v366
        %v465 = vpop.f32.mrb[0].mxu0
        %v466 = vadd.f32 %v417, %v465
        %v467 = vpop.f32.mrb[0].mxu0
        %v468 = vpop.f32.mrb[0].mxu0
        %v469 = vpop.f32.mrb[0].mxu0
        %470 = vdwg.mxu0
        %v471 = vld [vmem:[#allocation8] sm:$0xf]
        %v472 = vld [vmem:[#allocation8 + $0x4] sm:$0xf]
        %v473 = vld [vmem:[#allocation8 + $0x8] sm:$0xf]
        %v474 = vld [vmem:[#allocation8 + $0xc] sm:$0xf]
        %v475 = vld [vmem:[%s6] sm:$0x1]
        %v477 = vlaneseq
        %v478 = vshrl.u32 %v477, 7
        %v479 = vsub.s32 0, %v478
        %v480 = vrot.slane %v475, %v479
        %v486 = vunpack.c.l.b16 %v471
        %v487 = vunpack.c.l.b16 %v472
        %v488 = vunpack.c.l.b16 %v473
        %v489 = vunpack.c.l.b16 %v474
        %v490 = vpack.c.b16 %v487, %v486
        %v491 = vpack.c.b16 %v489, %v488
        %494 = vmatprep.subr.bf16.mxu0 0
        %495 = vmatpush1.bf16.msra.mxu0 %v490
        %496 = vmatprep.subr.bf16.mxu0 0
        %497 = vmatpush1.bf16.msra.mxu0 %v491
        %498 = vmatprep.subr.bf16.mxu0 0
        %499 = vmatpush1.bf16.msra.mxu0 0
        %500 = vmatprep.subr.bf16.mxu0 0
        %501 = vmatpush1.bf16.msra.mxu0 0
        %502 = vmatprep.subr.bf16.mxu0 0
        %503 = vmatpush1.bf16.msra.mxu0 0
        %504 = vmatprep.subr.bf16.mxu0 0
        %505 = vmatpush1.bf16.msra.mxu0 0
        %506 = vmatprep.subr.bf16.mxu0 0
        %507 = vmatpush1.bf16.msra.mxu0 0
        %508 = vmatprep.subr.bf16.mxu0 0
        %509 = vmatpush1.bf16.msra.mxu0 0
        %510 = vmatprep.subr.bf16.mxu0 0
        %511 = vmatpush1.bf16.msra.mxu0 0
        %512 = vmatprep.subr.bf16.mxu0 0
        %513 = vmatpush1.bf16.msra.mxu0 0
        %514 = vmatprep.subr.bf16.mxu0 0
        %515 = vmatpush1.bf16.msra.mxu0 0
        %516 = vmatprep.subr.bf16.mxu0 0
        %517 = vmatpush1.bf16.msra.mxu0 0
        %518 = vmatprep.subr.bf16.mxu0 0
        %519 = vmatpush1.bf16.msra.mxu0 0
        %520 = vmatprep.subr.bf16.mxu0 0
        %521 = vmatpush1.bf16.msra.mxu0 0
        %522 = vmatprep.subr.bf16.mxu0 0
        %523 = vmatpush1.bf16.msra.mxu0 0
        %524 = vmatprep.subr.bf16.mxu0 0
        %525 = vmatpush1.bf16.msra.mxu0 0
        %526 = vmatprep.mubr.bf16.mxu0 0
        %527 = vmatmul.mubr.bf16.gmra.mrb[0].mxu0 %v366
        %v528 = vpop.f32.mrb[0].mxu0
        %v529 = vadd.f32 %v480, %v528
        %v530 = vpop.f32.mrb[0].mxu0
        %v531 = vpop.f32.mrb[0].mxu0
        %v532 = vpop.f32.mrb[0].mxu0
        %533 = vdwg.mxu0
        %v534 = vpack.c.bf16 %v403, %v403
        %v535 = vpack.c.bf16 %v466, %v466
        %v536 = vpack.c.bf16 %v529, %v529
        %v538 = vsel %vm364, %v534, 0
        %v541 = vsel %vm364, %v535, 0
        %543 = vmatprep.subr.bf16.mxu0 0
        %544 = vmatpush1.bf16.xpose.msra.mxu0 %v541
        %545 = vmatprep.subr.bf16.mxu0 0
        %546 = vmatpush1.bf16.xpose.msra.mxu0 0
        %547 = vmatprep.subr.bf16.mxu0 0
        %548 = vmatpush1.bf16.xpose.msra.mxu0 0
        %549 = vmatprep.subr.bf16.mxu0 0
        %550 = vmatpush1.bf16.xpose.msra.mxu0 0
        %551 = vmatprep.subr.bf16.mxu0 0
        %552 = vmatpush1.bf16.xpose.msra.mxu0 0
        %553 = vmatprep.subr.bf16.mxu0 0
        %554 = vmatpush1.bf16.xpose.msra.mxu0 0
        %555 = vmatprep.subr.bf16.mxu0 0
        %556 = vmatpush1.bf16.xpose.msra.mxu0 0
        %557 = vmatprep.subr.bf16.mxu0 0
        %558 = vmatpush1.bf16.xpose.msra.mxu0 0
        %559 = vmatprep.subr.bf16.mxu0 0
        %560 = vmatpush1.bf16.xpose.msra.mxu0 0
        %561 = vmatprep.subr.bf16.mxu0 0
        %562 = vmatpush1.bf16.xpose.msra.mxu0 0
        %563 = vmatprep.subr.bf16.mxu0 0
        %564 = vmatpush1.bf16.xpose.msra.mxu0 0
        %565 = vmatprep.subr.bf16.mxu0 0
        %566 = vmatpush1.bf16.xpose.msra.mxu0 0
        %567 = vmatprep.subr.bf16.mxu0 0
        %568 = vmatpush1.bf16.xpose.msra.mxu0 0
        %569 = vmatprep.subr.bf16.mxu0 0
        %570 = vmatpush1.bf16.xpose.msra.mxu0 0
        %571 = vmatprep.subr.bf16.mxu0 0
        %572 = vmatpush1.bf16.xpose.msra.mxu0 0
        %573 = vmatprep.subr.bf16.mxu0 0
        %574 = vmatpush1.bf16.xpose.msra.mxu0 0
        %575 = vmatprep.mubr.bf16.mxu0 0
        %576 = vmatmul.mubr.bf16.gmra.mrb[0].mxu0 %v538
        %v577 = vpop.f32.mrb[0].mxu0
        %v578 = vadd.f32 0.0, %v577
        %v579 = vpop.f32.mrb[0].mxu0
        %v580 = vpop.f32.mrb[0].mxu0
        %v581 = vpop.f32.mrb[0].mxu0
        %582 = vdwg.mxu0
        %vm583 = vcmask 64512
        %v584 = vsel %vm583, %v578, -inf
        %585 = vmax.xlane.f32.xlu0 %v584
        %v586 = vpop.xlane.xlu0 %585
        %v587 = vsub.f32 %v578, %v586
        %v588 = vmul.f32 %v587, 1.442695
        %v589 = vpow.pop %v588
        %v590 = vsel %vm583, %v589, 0.0
        %591 = vadd.xlane.f32.xlu0 %v590
        %v592 = vpop.xlane.xlu0 %591
        %v593 = vrcp.pop %v592
        %v594 = vmul.f32 %v589, %v593
        %v595 = vpack.c.bf16 %v594, %v594
        %v597 = vsel %vm583, %v595, 0
        %vm599 = vcmask 1043456
        %v601 = vsel %vm599, %v536, 0
        %603 = vmatprep.subr.bf16.mxu0 0
        %604 = vmatpush1.bf16.msra.mxu0 %v601
        %605 = vmatprep.subr.bf16.mxu0 0
        %606 = vmatpush1.bf16.msra.mxu0 0
        %607 = vmatprep.subr.bf16.mxu0 0
        %608 = vmatpush1.bf16.msra.mxu0 0
        %609 = vmatprep.subr.bf16.mxu0 0
        %610 = vmatpush1.bf16.msra.mxu0 0
        %611 = vmatprep.subr.bf16.mxu0 0
        %612 = vmatpush1.bf16.msra.mxu0 0
        %613 = vmatprep.subr.bf16.mxu0 0
        %614 = vmatpush1.bf16.msra.mxu0 0
        %615 = vmatprep.subr.bf16.mxu0 0
        %616 = vmatpush1.bf16.msra.mxu0 0
        %617 = vmatprep.subr.bf16.mxu0 0
        %618 = vmatpush1.bf16.msra.mxu0 0
        %619 = vmatprep.subr.bf16.mxu0 0
        %620 = vmatpush1.bf16.msra.mxu0 0
        %621 = vmatprep.subr.bf16.mxu0 0
        %622 = vmatpush1.bf16.msra.mxu0 0
        %623 = vmatprep.subr.bf16.mxu0 0
        %624 = vmatpush1.bf16.msra.mxu0 0
        %625 = vmatprep.subr.bf16.mxu0 0
        %626 = vmatpush1.bf16.msra.mxu0 0
        %627 = vmatprep.subr.bf16.mxu0 0
        %628 = vmatpush1.bf16.msra.mxu0 0
        %629 = vmatprep.subr.bf16.mxu0 0
        %630 = vmatpush1.bf16.msra.mxu0 0
        %631 = vmatprep.subr.bf16.mxu0 0
        %632 = vmatpush1.bf16.msra.mxu0 0
        %633 = vmatprep.subr.bf16.mxu0 0
        %634 = vmatpush1.bf16.msra.mxu0 0
        %635 = vmatprep.mubr.bf16.mxu0 0
        %636 = vmatmul.mubr.bf16.gmra.mrb[0].mxu0 %v597
        %v637 = vpop.f32.mrb[0].mxu0
        %v638 = vadd.f32 0.0, %v637
        %v639 = vpop.f32.mrb[0].mxu0
        %v640 = vpop.f32.mrb[0].mxu0
        %v641 = vpop.f32.mrb[0].mxu0
        %642 = vdwg.mxu0
        %643 = vst.msk [vmem:[%s337] sm:$0xff] %vm364, %v638
        %s644 = sand.u32 %s186, 1
        %s645 = scalar_lea.sflag [#allocation4], %s644
        %s646 = sand.u32 %s186, 1
        %s647 = smul.addr %s646, 8
        %s648 = scalar_lea.vmem [#allocation10], %s647
        // Predicated region
        $region65: #{tpu_custom_call.1} parent=47 // pred_check
          %p649 = pneg %p196
        $region66: #{tpu_custom_call.1} parent=47 // pred_check_branch
          %651 = sbr.rel (%p649) target = $region68
        $region67: #{tpu_custom_call.1} parent=47 // pred_region
          %s653 = ssub.s32 128, 128
          %654 = vsyncadd %s645, %s653
          %s655 = smul.addr %s26, 128
          %s656 = scalar_lea.hbm %s7, %s655
          %s658 = sshll.u32 %s648, 4
          %s659 = int_to_ptr.vmem [resolvable:$true] %s658
          %661 = dma.vmem_to_hbm [thread:$0]  %s659, 128, %s656, %s645
        $region68: #{tpu_custom_call.1} parent=47 // pred_fallthru
          _
      $region48: #{tpu_custom_call.1} parent=5 // pred_fallthru
        _
      %p662 = scmp.le.s32.totalorder 2, %s21
      // Predicated region
      $region69: #{tpu_custom_call.1} parent=5 // pred_check
        %p663 = pneg %p662
      $region70: #{tpu_custom_call.1} parent=5 // pred_check_branch
        %665 = sbr.rel (%p663) target = $region72
      $region71: #{tpu_custom_call.1} parent=5 // pred_region
        %s666 = ssub.s32 %s21, 2
        // Predicated region
        $region73: #{tpu_custom_call.1} parent=71 // pred_check
          %p667 = pneg %p202
        $region74: #{tpu_custom_call.1} parent=71 // pred_check_branch
          %669 = sbr.rel (%p667) target = $region76
        $region75: #{tpu_custom_call.1} parent=71 // pred_region
          %s670 = sand.u32 %s187, 1
          %s671 = scalar_lea.sflag [#allocation4], %s670
          %s672 = sand.u32 %s187, 1
          %s673 = smul.addr %s672, 8
          %s674 = scalar_lea.vmem [#allocation10], %s673
          %675 = dma.done %s671, 128
        $region76: #{tpu_custom_call.1} parent=71 // pred_fallthru
          _
      $region72: #{tpu_custom_call.1} parent=5 // pred_fallthru
        _
    $region6: #{tpu_custom_call.1} parent=1 // loop_footer
      %s25 = sadd.s32 1, %s21
    $region7: #{tpu_custom_call.1} parent=1 // loop_footer_branch
      %20 = sbr.rel target = $region3
    $region8: #{tpu_custom_call.1} parent=1 // loop_exit
      _
    %676 = vsyncpa [#allocation3], 1
    %s677 = scalar_lea.sflag [#allocation3], 1
    %678 = vsyncpa %s677, 1
    %679 = vsyncpa [#allocation6], 1
    %680 = vsyncpa [#allocation9], 1
    %681 = vsyncpa [#allocation4], 1
    %s682 = scalar_lea.sflag [#allocation4], 1
    %683 = vsyncpa %s682, 1

</llo_original>
